<compile_context>
chip_gen: v7x
topology: tpu7x:2x2x1
jax: 0.10.0
libtpu: 0.0.40
codegen_flags: <defaults>
</compile_context>

<pallas_src>
import functools

import jax
import jax.numpy as jnp
from jax import lax
from jax.experimental import pallas as pl
from jax.experimental.pallas import tpu as pltpu


MASK_VALUE = -1e30  # large finite negative: keeps exp()/max() finite. With the
                    # causal schedule every computed row has >=1 live column
                    # (tile ki==0 always contributes column 0), so the
                    # exp(MASK-MASK)=1 pathology cannot occur here.


# ---------------------------------------------------------------------------
# Kernel 1: fused QKV projection, head-split (B, H, T, hs) bf16 output layout.
# ---------------------------------------------------------------------------
def _qkv_proj_kernel(x_ref, w_ref, q_ref, k_ref, v_ref, *, num_heads, head_size):
    H, hs = num_heads, head_size
    x = x_ref[0]                                           # (tp, C) bf16
    qkv = jnp.dot(x, w_ref[...],
                  preferred_element_type=jnp.float32)      # (tp, 3*H*hs) f32
    qkv = qkv.astype(jnp.bfloat16)
    # Head split happens ONCE per token here (not once per (q-tile, kv-tile)
    # pair), so the attention kernel below has no per-step relayout loops.
    for h in range(H):
        q_ref[0, h] = qkv[:, h * hs:(h + 1) * hs]
        k_ref[0, h] = qkv[:, (H + h) * hs:(H + h + 1) * hs]
        v_ref[0, h] = qkv[:, (2 * H + h) * hs:(2 * H + h + 1) * hs]


# ---------------------------------------------------------------------------
# Kernel 2: flash attention (online softmax over kv tiles) + output projection.
# ---------------------------------------------------------------------------
def _flash_attn_kernel(q_ref, k_ref, v_ref, wp_ref, bp_ref, o_ref,
                       m_scr, l_scr, acc_scr, o_scr,
                       *, num_heads, head_size, tq, tk):
    H, hs = num_heads, head_size
    qi = pl.program_id(1)
    ki = pl.program_id(2)
    # Last kv tile intersecting the causal mask for this q tile.  The same
    # expression drives the compute predicate, the finalize predicate and the
    # clamped kv index_map in the wrapper -> consistent for any tq/tk combo.
    last_ki = ((qi + 1) * tq - 1) // tk

    @pl.when(ki == 0)
    def _init():
        m_scr[...] = jnp.full(m_scr.shape, MASK_VALUE, dtype=m_scr.dtype)
        l_scr[...] = jnp.zeros(l_scr.shape, dtype=l_scr.dtype)
        acc_scr[...] = jnp.zeros(acc_scr.shape, dtype=acc_scr.dtype)

    @pl.when(ki <= last_ki)            # skip kv tiles strictly above diagonal
    def _compute():
        q = q_ref[0]                   # (H, tq, hs) bf16
        k = k_ref[0]                   # (H, tk, hs) bf16
        v = v_ref[0]                   # (H, tk, hs) bf16

        # Head-batched QK^T on the MXU, f32 accumulation (scale folded into Wq).
        s = jnp.einsum('hqd,hkd->hqk', q, k,
                       preferred_element_type=jnp.float32)      # (H, tq, tk)

        # Causal mask in global coordinates.
        row = qi * tq + lax.broadcasted_iota(jnp.int32, (tq, tk), 0)
        col = ki * tk + lax.broadcasted_iota(jnp.int32, (tq, tk), 1)
        s = jnp.where((col <= row)[None, :, :], s, MASK_VALUE)

        # Online softmax update; running stats are (H, tq) f32 (lane = tq).
        m_prev = m_scr[...]
        m_new = jnp.maximum(m_prev, jnp.max(s, axis=-1))         # (H, tq)
        alpha = jnp.exp(m_prev - m_new)                          # (H, tq)
        # TODO(synk): on v6e/v7x this exp could be issued in bf16 (~2x EUP
        # throughput); kept in f32 so the same kernel stays optimal on v5e.
        p = jnp.exp(s - m_new[:, :, None])                       # (H, tq, tk)
        l_scr[...] = alpha * l_scr[...] + jnp.sum(p, axis=-1)
        acc_scr[...] = alpha[:, :, None] * acc_scr[...] + jnp.einsum(
            'hqk,hkd->hqd', p.astype(jnp.bfloat16), v,
            preferred_element_type=jnp.float32)                  # (H, tq, hs)
        m_scr[...] = m_new
        # TODO(synk): attention dropout omitted (eval mode -> identity).

    # Finalize right after the last COMPUTED kv tile: with the clamped kv
    # index_map the dead upper-triangle steps become true no-ops and the Wp
    # matmul / output writeback overlap the next q tile's prologue.
    @pl.when(ki == last_ki)
    def _finalize():
        inv_l = pl.reciprocal(l_scr[...], approx=True)           # EUP slot
        out = acc_scr[...] * inv_l[:, :, None]                   # (H, tq, hs)
        # Once-per-q-tile head gather into a lane-dense (tq, H*hs) slab;
        # this is epilogue work (~1/C of the Wp matmul), not per-kv-step work.
        for h in range(H):
            o_scr[:, h * hs:(h + 1) * hs] = out[h]
        y = jnp.dot(o_scr[...].astype(jnp.bfloat16), wp_ref[...],
                    preferred_element_type=jnp.float32) + bp_ref[...]
        o_ref[0] = y.astype(o_ref.dtype)
        # TODO(synk): residual dropout omitted (eval mode -> identity).


# ---------------------------------------------------------------------------
# Host-side wrapper.
# ---------------------------------------------------------------------------
def _round_up(x, m):
    return (x + m - 1) // m * m


def _pick_tile(n, target):
    t = min(n, target)
    while n % t:
        t -= 1
    return t


def _tile_bytes(shape, dtype_bytes):
    """Rough padded VMEM footprint of one buffer under (8,128) tiling."""
    if len(shape) == 1:
        return max(_round_up(shape[0] * dtype_bytes, 512), 512)
    *lead, s, l = shape
    n = 1
    for d in lead:
        n *= d
    sub = 16 if dtype_bytes == 2 else 8
    return n * _round_up(max(s, 1), sub) * _round_up(max(l, 1), 128) * dtype_bytes


def multi_head_attention(x, wk, wq, wv, wp, bp, *, num_heads,
                         tq=None, tk=None, tp=None):
    """Forward pass matching MultiHeadAttention.forward (eval mode)."""
    B, T, C = x.shape
    head_size = wq.shape[1] // num_heads
    H, hs = num_heads, head_size
    out_dtype = x.dtype

    # 256 targets the v6e/v7x 256-wide MXU; v5e is equally happy at 128-256.
    # On v7x (64 MiB VMEM) the budget below should be re-derived and tiles
    # dropped to 128x256 if it does not fit.
    tq = _pick_tile(T, 256) if tq is None else tq
    tk = _pick_tile(T, 256) if tk is None else tk
    tp = _pick_tile(T, 256) if tp is None else tp
    assert T % tq == 0 and T % tk == 0 and T % tp == 0, "seq must be tileable"
    nq, nk = T // tq, T // tk

    # Host-side prep: fold 1/sqrt(hs) into Wq, fuse QKV weights, pre-cast bf16.
    scale = head_size ** -0.5
    w_qkv = jnp.concatenate([wq * scale, wk, wv], axis=1).astype(jnp.bfloat16)
    wp_b = wp.astype(jnp.bfloat16)
    bp_f = bp.astype(jnp.float32)
    x_b = x.astype(jnp.bfloat16)

    # ---------------------------------------------------------- projections
    proj_vmem = int(1.25 * (
        2 * _tile_bytes((tp, C), 2)                 # x block (double buffered)
        + 1 * _tile_bytes((C, 3 * H * hs), 2)       # fused weight (single buf)
        + 3 * 2 * _tile_bytes((H, tp, hs), 2)       # q/k/v output blocks
        + 2 * _tile_bytes((tp, 3 * H * hs), 4)))    # matmul temporaries
    proj_vmem = min(max(proj_vmem, 32 << 20), 120 << 20)

    qkv_shape = jax.ShapeDtypeStruct((B, H, T, hs), jnp.bfloat16)
    q, k, v = pl.pallas_call(
        functools.partial(_qkv_proj_kernel, num_heads=H, head_size=hs),
        out_shape=(qkv_shape, qkv_shape, qkv_shape),
        grid=(B, T // tp),
        in_specs=[
            pl.BlockSpec((1, tp, C), lambda b, t: (b, t, 0)),
            pl.BlockSpec((C, 3 * H * hs), lambda b, t: (0, 0),
                         pipeline_mode=pl.Buffered(1)),   # grid-invariant
        ],
        out_specs=(
            pl.BlockSpec((1, H, tp, hs), lambda b, t: (b, 0, t, 0)),
            pl.BlockSpec((1, H, tp, hs), lambda b, t: (b, 0, t, 0)),
            pl.BlockSpec((1, H, tp, hs), lambda b, t: (b, 0, t, 0)),
        ),
        compiler_params=pltpu.CompilerParams(
            dimension_semantics=("parallel", "parallel"),
            vmem_limit_bytes=proj_vmem),
    )(x_b, w_qkv)

    # ------------------------------------------------------------ attention
    def kv_index(b, qi, ki):
        # Clamp to the last causally-relevant kv tile: dead (fully masked)
        # steps re-reference the resident block -> no extra DMA / HBM traffic.
        # TODO(synk): flattening the (qi, ki) triangle into a 1-D grid axis via
        # PrefetchScalarGridSpec would also remove the dead grid steps.
        return (b, 0, jnp.minimum(ki, ((qi + 1) * tq - 1) // tk), 0)

    flash_vmem = int(1.25 * (
        2 * _tile_bytes((H, tq, hs), 2)             # q block
        + 2 * 2 * _tile_bytes((H, tk, hs), 2)       # k, v blocks
        + 1 * _tile_bytes((H * hs, C), 2)           # Wp (single buffered)
        + 1 * _tile_bytes((1, C), 4)                # bias
        + 2 * _tile_bytes((tq, C), 4)               # output block
        + 2 * _tile_bytes((H, tq), 4)               # m, l scratch
        + _tile_bytes((H, tq, hs), 4)               # acc scratch
        + _tile_bytes((tq, H * hs), 4)              # head-gather scratch
        + 4 * _tile_bytes((H, tq, tk), 4)))         # s / p temporaries
    flash_vmem = min(max(flash_vmem, 32 << 20), 120 << 20)

    kernel = functools.partial(_flash_attn_kernel, num_heads=H, head_size=hs,
                               tq=tq, tk=tk)

    return pl.pallas_call(
        kernel,
        out_shape=jax.ShapeDtypeStruct((B, T, C), out_dtype),
        grid=(B, nq, nk),
        in_specs=[
            pl.BlockSpec((1, H, tq, hs), lambda b, qi, ki: (b, 0, qi, 0)),
            pl.BlockSpec((1, H, tk, hs), kv_index),
            pl.BlockSpec((1, H, tk, hs), kv_index),
            pl.BlockSpec((H * hs, C), lambda b, qi, ki: (0, 0),
                         pipeline_mode=pl.Buffered(1)),   # grid-invariant Wp
            pl.BlockSpec((1, C), lambda b, qi, ki: (0, 0),
                         pipeline_mode=pl.Buffered(1)),   # grid-invariant bias
        ],
        out_specs=pl.BlockSpec((1, tq, C), lambda b, qi, ki: (b, qi, 0)),
        scratch_shapes=[
            pltpu.VMEM((H, tq), jnp.float32),        # running max
            pltpu.VMEM((H, tq), jnp.float32),        # running sum
            pltpu.VMEM((H, tq, hs), jnp.float32),    # f32 P@V accumulator
            pltpu.VMEM((tq, H * hs), jnp.float32),   # head gather (finalize)
        ],
        compiler_params=pltpu.CompilerParams(
            # batch/q-tile axes shard across TensorCores (B*nq >= 2 keeps both
            # v7x cores busy); kv axis carries the online-softmax state.
            dimension_semantics=("parallel", "parallel", "arbitrary"),
            vmem_limit_bytes=flash_vmem),
    )(q, k, v, wp_b, bp_f)


# ---------------------------------------------------------------------------
# Pure-JAX f32 reference matching the PyTorch forward (eval mode).
# ---------------------------------------------------------------------------
def reference_mha(x, wk, wq, wv, wp, bp, *, num_heads):
    B, T, C = x.shape
    hs = wq.shape[1] // num_heads
    k = x @ wk
    q = x @ wq
    v = x @ wv
    causal = jnp.tril(jnp.ones((T, T), dtype=bool))
    outs = []
    for h in range(num_heads):
        kh = k[..., h * hs:(h + 1) * hs]
        qh = q[..., h * hs:(h + 1) * hs]
        vh = v[..., h * hs:(h + 1) * hs]
        wei = jnp.einsum('btd,bsd->bts', qh, kh) * (hs ** -0.5)
        wei = jnp.where(causal[None], wei, -jnp.inf)
        wei = jax.nn.softmax(wei, axis=-1)
        outs.append(jnp.einsum('bts,bsd->btd', wei, vh))
    out = jnp.concatenate(outs, axis=-1)
    return out @ wp + bp[0]


if __name__ == "__main__":
    B, T, C = 2, 16, 32
    num_heads = 4
    head_size = C // num_heads

    key = jax.random.PRNGKey(0)
    kx, kk, kq, kv, kp, kb = jax.random.split(key, 6)

    x = jax.random.normal(kx, (B, T, C), dtype=jnp.float32)
    # Deterministic parameter init (shapes follow the module __init__: per-head
    # K/Q/V weights stacked into (C, H*hs), output projection (H*hs, C) + bias).
    wk = jax.random.normal(kk, (C, num_heads * head_size), dtype=jnp.float32) * 0.1
    wq = jax.random.normal(kq, (C, num_heads * head_size), dtype=jnp.float32) * 0.1
    wv = jax.random.normal(kv, (C, num_heads * head_size), dtype=jnp.float32) * 0.1
    wp = jax.random.normal(kp, (num_heads * head_size, C), dtype=jnp.float32) * 0.1
    bp = jax.random.normal(kb, (1, C), dtype=jnp.float32) * 0.1

    # tq=tk=tp=8 with T=16 exercises multiple q/kv tiles, the online-softmax
    # carry, the causal block skip + clamped kv DMA and the early finalize.
    out = multi_head_attention(x, wk, wq, wv, wp, bp, num_heads=num_heads,
                               tq=8, tk=8, tp=8)
    out = jax.block_until_ready(out)

    ref = reference_mha(x, wk, wq, wv, wp, bp, num_heads=num_heads)
    assert out.shape == (B, T, C)
    max_err = float(jnp.max(jnp.abs(out - ref)))
    # bf16 matmul operands + approx reciprocal -> loosened tolerance vs f32 ref.
    assert jnp.allclose(out, ref, rtol=2e-2, atol=2e-2), (
        f"mismatch vs reference (max abs err {max_err})")

    print("KERNEL_OK")
</pallas_src>

<mosaic_0001>
module attributes {stable_mosaic.version = 11 : i64} {
  func.func @_qkv_proj_kernel(%arg0: i32, %arg1: i32, %arg2: memref<1x8x32xbf16, #tpu.memory_space<vmem>>, %arg3: memref<32x96xbf16, #tpu.memory_space<vmem>>, %arg4: memref<1x4x8x8xbf16, #tpu.memory_space<vmem>>, %arg5: memref<1x4x8x8xbf16, #tpu.memory_space<vmem>>, %arg6: memref<1x4x8x8xbf16, #tpu.memory_space<vmem>>) attributes {dimension_semantics = [#tpu.dimension_semantics<parallel>, #tpu.dimension_semantics<parallel>], iteration_bounds = array<i64: 2, 2>, scalar_prefetch = 0 : i64, scratch_operands = 0 : i64, tpu.core_type = #tpu.core_type<tc>, window_params = [{transform_indices = @transform_0, window_bounds = array<i64: 1, 8, 32>}, {pipeline_mode = #tpu.pipeline_mode<synchronous>, transform_indices = @transform_1, window_bounds = array<i64: 32, 96>}, {transform_indices = @transform_2, window_bounds = array<i64: 1, 4, 8, 8>}, {transform_indices = @transform_3, window_bounds = array<i64: 1, 4, 8, 8>}, {transform_indices = @transform_4, window_bounds = array<i64: 1, 4, 8, 8>}]} {
    %c0 = arith.constant 0 : index
    %c0_0 = arith.constant 0 : index
    %c0_1 = arith.constant 0 : index
    %0 = vector.load %arg2[%c0, %c0_0, %c0_1] : memref<1x8x32xbf16, #tpu.memory_space<vmem>>, vector<1x8x32xbf16>
    %1 = vector.shape_cast %0 : vector<1x8x32xbf16> to vector<8x32xbf16>
    %c0_2 = arith.constant 0 : index
    %c0_3 = arith.constant 0 : index
    %2 = vector.load %arg3[%c0_2, %c0_3] : memref<32x96xbf16, #tpu.memory_space<vmem>>, vector<32x96xbf16>
    %cst = arith.constant dense<0.000000e+00> : vector<8x96xf32>
    %3 = tpu.matmul %1, %2, %cst {dimension_numbers = #tpu.dot_dimension_numbers<[1], [0], [0], [1], [0, 0, 1, 1], [], []>} : vector<8x32xbf16>, vector<32x96xbf16>, vector<8x96xf32> -> vector<8x96xf32>
    %4 = arith.truncf %3 : vector<8x96xf32> to vector<8x96xbf16>
    %5 = vector.extract_strided_slice %4 {offsets = [0, 0], sizes = [8, 8], strides = [1, 1]} : vector<8x96xbf16> to vector<8x8xbf16>
    %c0_4 = arith.constant 0 : index
    %c0_5 = arith.constant 0 : index
    %c0_6 = arith.constant 0 : index
    %c0_7 = arith.constant 0 : index
    %6 = vector.load %arg4[%c0_4, %c0_5, %c0_6, %c0_7] : memref<1x4x8x8xbf16, #tpu.memory_space<vmem>>, vector<1x1x8x8xbf16>
    %7 = vector.shape_cast %6 : vector<1x1x8x8xbf16> to vector<8x8xbf16>
    %8 = vector.shape_cast %5 : vector<8x8xbf16> to vector<1x1x8x8xbf16>
    tpu.vector_store %arg4[%c0_4, %c0_5, %c0_6, %c0_7], %8 {strides = array<i32>} : memref<1x4x8x8xbf16, #tpu.memory_space<vmem>>, vector<1x1x8x8xbf16>,
    %9 = vector.extract_strided_slice %4 {offsets = [0, 32], sizes = [8, 8], strides = [1, 1]} : vector<8x96xbf16> to vector<8x8xbf16>
    %c0_8 = arith.constant 0 : index
    %c0_9 = arith.constant 0 : index
    %c0_10 = arith.constant 0 : index
    %c0_11 = arith.constant 0 : index
    %10 = vector.load %arg5[%c0_8, %c0_9, %c0_10, %c0_11] : memref<1x4x8x8xbf16, #tpu.memory_space<vmem>>, vector<1x1x8x8xbf16>
    %11 = vector.shape_cast %10 : vector<1x1x8x8xbf16> to vector<8x8xbf16>
    %12 = vector.shape_cast %9 : vector<8x8xbf16> to vector<1x1x8x8xbf16>
    tpu.vector_store %arg5[%c0_8, %c0_9, %c0_10, %c0_11], %12 {strides = array<i32>} : memref<1x4x8x8xbf16, #tpu.memory_space<vmem>>, vector<1x1x8x8xbf16>,
    %13 = vector.extract_strided_slice %4 {offsets = [0, 64], sizes = [8, 8], strides = [1, 1]} : vector<8x96xbf16> to vector<8x8xbf16>
    %c0_12 = arith.constant 0 : index
    %c0_13 = arith.constant 0 : index
    %c0_14 = arith.constant 0 : index
    %c0_15 = arith.constant 0 : index
    %14 = vector.load %arg6[%c0_12, %c0_13, %c0_14, %c0_15] : memref<1x4x8x8xbf16, #tpu.memory_space<vmem>>, vector<1x1x8x8xbf16>
    %15 = vector.shape_cast %14 : vector<1x1x8x8xbf16> to vector<8x8xbf16>
    %16 = vector.shape_cast %13 : vector<8x8xbf16> to vector<1x1x8x8xbf16>
    tpu.vector_store %arg6[%c0_12, %c0_13, %c0_14, %c0_15], %16 {strides = array<i32>} : memref<1x4x8x8xbf16, #tpu.memory_space<vmem>>, vector<1x1x8x8xbf16>,
    %17 = vector.extract_strided_slice %4 {offsets = [0, 8], sizes = [8, 8], strides = [1, 1]} : vector<8x96xbf16> to vector<8x8xbf16>
    %c0_16 = arith.constant 0 : index
    %c1 = arith.constant 1 : index
    %c0_17 = arith.constant 0 : index
    %c0_18 = arith.constant 0 : index
    %18 = vector.load %arg4[%c0_16, %c1, %c0_17, %c0_18] : memref<1x4x8x8xbf16, #tpu.memory_space<vmem>>, vector<1x1x8x8xbf16>
    %19 = vector.shape_cast %18 : vector<1x1x8x8xbf16> to vector<8x8xbf16>
    %20 = vector.shape_cast %17 : vector<8x8xbf16> to vector<1x1x8x8xbf16>
    tpu.vector_store %arg4[%c0_16, %c1, %c0_17, %c0_18], %20 {strides = array<i32>} : memref<1x4x8x8xbf16, #tpu.memory_space<vmem>>, vector<1x1x8x8xbf16>,
    %21 = vector.extract_strided_slice %4 {offsets = [0, 40], sizes = [8, 8], strides = [1, 1]} : vector<8x96xbf16> to vector<8x8xbf16>
    %c0_19 = arith.constant 0 : index
    %c1_20 = arith.constant 1 : index
    %c0_21 = arith.constant 0 : index
    %c0_22 = arith.constant 0 : index
    %22 = vector.load %arg5[%c0_19, %c1_20, %c0_21, %c0_22] : memref<1x4x8x8xbf16, #tpu.memory_space<vmem>>, vector<1x1x8x8xbf16>
    %23 = vector.shape_cast %22 : vector<1x1x8x8xbf16> to vector<8x8xbf16>
    %24 = vector.shape_cast %21 : vector<8x8xbf16> to vector<1x1x8x8xbf16>
    tpu.vector_store %arg5[%c0_19, %c1_20, %c0_21, %c0_22], %24 {strides = array<i32>} : memref<1x4x8x8xbf16, #tpu.memory_space<vmem>>, vector<1x1x8x8xbf16>,
    %25 = vector.extract_strided_slice %4 {offsets = [0, 72], sizes = [8, 8], strides = [1, 1]} : vector<8x96xbf16> to vector<8x8xbf16>
    %c0_23 = arith.constant 0 : index
    %c1_24 = arith.constant 1 : index
    %c0_25 = arith.constant 0 : index
    %c0_26 = arith.constant 0 : index
    %26 = vector.load %arg6[%c0_23, %c1_24, %c0_25, %c0_26] : memref<1x4x8x8xbf16, #tpu.memory_space<vmem>>, vector<1x1x8x8xbf16>
    %27 = vector.shape_cast %26 : vector<1x1x8x8xbf16> to vector<8x8xbf16>
    %28 = vector.shape_cast %25 : vector<8x8xbf16> to vector<1x1x8x8xbf16>
    tpu.vector_store %arg6[%c0_23, %c1_24, %c0_25, %c0_26], %28 {strides = array<i32>} : memref<1x4x8x8xbf16, #tpu.memory_space<vmem>>, vector<1x1x8x8xbf16>,
    %29 = vector.extract_strided_slice %4 {offsets = [0, 16], sizes = [8, 8], strides = [1, 1]} : vector<8x96xbf16> to vector<8x8xbf16>
    %c0_27 = arith.constant 0 : index
    %c2 = arith.constant 2 : index
    %c0_28 = arith.constant 0 : index
    %c0_29 = arith.constant 0 : index
    %30 = vector.load %arg4[%c0_27, %c2, %c0_28, %c0_29] : memref<1x4x8x8xbf16, #tpu.memory_space<vmem>>, vector<1x1x8x8xbf16>
    %31 = vector.shape_cast %30 : vector<1x1x8x8xbf16> to vector<8x8xbf16>
    %32 = vector.shape_cast %29 : vector<8x8xbf16> to vector<1x1x8x8xbf16>
    tpu.vector_store %arg4[%c0_27, %c2, %c0_28, %c0_29], %32 {strides = array<i32>} : memref<1x4x8x8xbf16, #tpu.memory_space<vmem>>, vector<1x1x8x8xbf16>,
    %33 = vector.extract_strided_slice %4 {offsets = [0, 48], sizes = [8, 8], strides = [1, 1]} : vector<8x96xbf16> to vector<8x8xbf16>
    %c0_30 = arith.constant 0 : index
    %c2_31 = arith.constant 2 : index
    %c0_32 = arith.constant 0 : index
    %c0_33 = arith.constant 0 : index
    %34 = vector.load %arg5[%c0_30, %c2_31, %c0_32, %c0_33] : memref<1x4x8x8xbf16, #tpu.memory_space<vmem>>, vector<1x1x8x8xbf16>
    %35 = vector.shape_cast %34 : vector<1x1x8x8xbf16> to vector<8x8xbf16>
    %36 = vector.shape_cast %33 : vector<8x8xbf16> to vector<1x1x8x8xbf16>
    tpu.vector_store %arg5[%c0_30, %c2_31, %c0_32, %c0_33], %36 {strides = array<i32>} : memref<1x4x8x8xbf16, #tpu.memory_space<vmem>>, vector<1x1x8x8xbf16>,
    %37 = vector.extract_strided_slice %4 {offsets = [0, 80], sizes = [8, 8], strides = [1, 1]} : vector<8x96xbf16> to vector<8x8xbf16>
    %c0_34 = arith.constant 0 : index
    %c2_35 = arith.constant 2 : index
    %c0_36 = arith.constant 0 : index
    %c0_37 = arith.constant 0 : index
    %38 = vector.load %arg6[%c0_34, %c2_35, %c0_36, %c0_37] : memref<1x4x8x8xbf16, #tpu.memory_space<vmem>>, vector<1x1x8x8xbf16>
    %39 = vector.shape_cast %38 : vector<1x1x8x8xbf16> to vector<8x8xbf16>
    %40 = vector.shape_cast %37 : vector<8x8xbf16> to vector<1x1x8x8xbf16>
    tpu.vector_store %arg6[%c0_34, %c2_35, %c0_36, %c0_37], %40 {strides = array<i32>} : memref<1x4x8x8xbf16, #tpu.memory_space<vmem>>, vector<1x1x8x8xbf16>,
    %41 = vector.extract_strided_slice %4 {offsets = [0, 24], sizes = [8, 8], strides = [1, 1]} : vector<8x96xbf16> to vector<8x8xbf16>
    %c0_38 = arith.constant 0 : index
    %c3 = arith.constant 3 : index
    %c0_39 = arith.constant 0 : index
    %c0_40 = arith.constant 0 : index
    %42 = vector.load %arg4[%c0_38, %c3, %c0_39, %c0_40] : memref<1x4x8x8xbf16, #tpu.memory_space<vmem>>, vector<1x1x8x8xbf16>
    %43 = vector.shape_cast %42 : vector<1x1x8x8xbf16> to vector<8x8xbf16>
    %44 = vector.shape_cast %41 : vector<8x8xbf16> to vector<1x1x8x8xbf16>
    tpu.vector_store %arg4[%c0_38, %c3, %c0_39, %c0_40], %44 {strides = array<i32>} : memref<1x4x8x8xbf16, #tpu.memory_space<vmem>>, vector<1x1x8x8xbf16>,
    %45 = vector.extract_strided_slice %4 {offsets = [0, 56], sizes = [8, 8], strides = [1, 1]} : vector<8x96xbf16> to vector<8x8xbf16>
    %c0_41 = arith.constant 0 : index
    %c3_42 = arith.constant 3 : index
    %c0_43 = arith.constant 0 : index
    %c0_44 = arith.constant 0 : index
    %46 = vector.load %arg5[%c0_41, %c3_42, %c0_43, %c0_44] : memref<1x4x8x8xbf16, #tpu.memory_space<vmem>>, vector<1x1x8x8xbf16>
    %47 = vector.shape_cast %46 : vector<1x1x8x8xbf16> to vector<8x8xbf16>
    %48 = vector.shape_cast %45 : vector<8x8xbf16> to vector<1x1x8x8xbf16>
    tpu.vector_store %arg5[%c0_41, %c3_42, %c0_43, %c0_44], %48 {strides = array<i32>} : memref<1x4x8x8xbf16, #tpu.memory_space<vmem>>, vector<1x1x8x8xbf16>,
    %49 = vector.extract_strided_slice %4 {offsets = [0, 88], sizes = [8, 8], strides = [1, 1]} : vector<8x96xbf16> to vector<8x8xbf16>
    %c0_45 = arith.constant 0 : index
    %c3_46 = arith.constant 3 : index
    %c0_47 = arith.constant 0 : index
    %c0_48 = arith.constant 0 : index
    %50 = vector.load %arg6[%c0_45, %c3_46, %c0_47, %c0_48] : memref<1x4x8x8xbf16, #tpu.memory_space<vmem>>, vector<1x1x8x8xbf16>
    %51 = vector.shape_cast %50 : vector<1x1x8x8xbf16> to vector<8x8xbf16>
    %52 = vector.shape_cast %49 : vector<8x8xbf16> to vector<1x1x8x8xbf16>
    tpu.vector_store %arg6[%c0_45, %c3_46, %c0_47, %c0_48], %52 {strides = array<i32>} : memref<1x4x8x8xbf16, #tpu.memory_space<vmem>>, vector<1x1x8x8xbf16>,
    return
  }
  func.func @transform_0(%arg0: i32, %arg1: i32) -> (i32, i32, i32) {
    %c0_i32 = arith.constant 0 : i32
    %c0_i32_0 = arith.constant 0 : i32
    return %arg0, %arg1, %c0_i32 : i32, i32, i32
  }
  func.func @transform_1(%arg0: i32, %arg1: i32) -> (i32, i32) {
    %c0_i32 = arith.constant 0 : i32
    %c0_i32_0 = arith.constant 0 : i32
    %c0_i32_1 = arith.constant 0 : i32
    return %c0_i32, %c0_i32_0 : i32, i32
  }
  func.func @transform_2(%arg0: i32, %arg1: i32) -> (i32, i32, i32, i32) {
    %c0_i32 = arith.constant 0 : i32
    %c0_i32_0 = arith.constant 0 : i32
    %c0_i32_1 = arith.constant 0 : i32
    return %arg0, %c0_i32, %arg1, %c0_i32_0 : i32, i32, i32, i32
  }
  func.func @transform_3(%arg0: i32, %arg1: i32) -> (i32, i32, i32, i32) {
    %c0_i32 = arith.constant 0 : i32
    %c0_i32_0 = arith.constant 0 : i32
    %c0_i32_1 = arith.constant 0 : i32
    return %arg0, %c0_i32, %arg1, %c0_i32_0 : i32, i32, i32, i32
  }
  func.func @transform_4(%arg0: i32, %arg1: i32) -> (i32, i32, i32, i32) {
    %c0_i32 = arith.constant 0 : i32
    %c0_i32_0 = arith.constant 0 : i32
    %c0_i32_1 = arith.constant 0 : i32
    return %arg0, %c0_i32, %arg1, %c0_i32_0 : i32, i32, i32, i32
  }
}

</mosaic_0001>

<llo_original>
// kernel: tpu_custom_call.1
$region0: #{tpu_custom_call.1}
  #allocation0 [shape = 'u32[]', space=smem, size = 0x4, offset = 0x4, fixed_abs, tag = 'smem constant byte address 0x4 - core index']
  #allocation1 [shape = 'u32[144,128]{1,0:T(1,128)}', space=vmem, size = 0x12000, scoped, tag = 'internal scratch']
  %s0 = inlined_call_operand.hbm [shape: bf16[2,16,32], index: 0, kind: input, shape index: {}]
  %s1 = inlined_call_operand.hbm [shape: bf16[32,96], index: 1, kind: input, shape index: {}]
  %s2 = inlined_call_operand.vmem [shape: bf16[2,4,16,8], index: 2, kind: output, shape index: {0}]
  %s3 = inlined_call_operand.vmem [shape: bf16[2,4,16,8], index: 3, kind: output, shape index: {1}]
  %s4 = inlined_call_operand.vmem [shape: bf16[2,4,16,8], index: 4, kind: output, shape index: {2}]
  %5 = xla_tuple %s2, %s3, %s4
  %s6 = sld [smem:[#allocation0]]
  $region176: #{tpu_custom_call.1} parent=0
    _
  %s8 = ssub.s32 1, %s6
  %s9 = scalar_select 0, %s8, %s6
  $region1: #{tpu_custom_call.1} parent=0
    #allocation2 [shape = 'u8[4096]{0}', space=vmem, size = 0x1000, scoped, tag = 'input window, operand 0']
    #allocation3 [shape = 's32[2]{0}', space=sflag, size = 0x8, scoped, tag = 'scoped memory for tpu_custom_call.1']
    #allocation4 [shape = 'u8[8192]{0}', space=vmem, size = 0x2000, scoped, tag = 'input window, operand 1, single buffered']
    #allocation5 [shape = 's32[1]{0}', space=sflag, size = 0x4, scoped, tag = 'scoped memory for tpu_custom_call.1']
    #allocation6 [shape = 'u8[16384]{0}', space=vmem, size = 0x4000, scoped, tag = 'output window, operand 0']
    #allocation7 [shape = 'u8[16384]{0}', space=vmem, size = 0x4000, scoped, tag = 'output window, operand 1']
    #allocation8 [shape = 'u8[16384]{0}', space=vmem, size = 0x4000, scoped, tag = 'output window, operand 2']
    %10 = vsyncpa [#allocation3], 0
    %s11 = scalar_lea.sflag [#allocation3], 1
    %12 = vsyncpa %s11, 0
    %13 = vsyncpa [#allocation5], 0
    loop: start=0, step=1, limit=6
    $region2: #{tpu_custom_call.1} parent=1 // loop_pre_header
      _
    $region3: #{tpu_custom_call.1} parent=1 // loop_header
      %s15 = sphi 0, %s19
      %p16 = scmp.ge.s32.totalorder %s15, 6
      %s22 = sphi 0, %s34
      %s23 = sphi 0, %s30
      %s24 = sphi 0, %s22
      %s25 = sphi 0, %s23
      %s26 = sphi 0, %s24
      %s27 = sphi 0, %s25
      %s39 = sphi 0, %s41
      %s42 = sphi 0, %s39
      %s43 = sphi 0, %s42
      %s59 = sphi 0, %s43
      %s63 = sphi 0, %s63
      %s65 = sphi 0, %s63
      %s66 = sphi 0, %s65
      %s80 = sphi 0, %s66
      %s88 = sphi 0, %s90
      %s91 = sphi 0, %s88
      %s92 = sphi 0, %s91
      %s108 = sphi 0, %s92
      %s116 = sphi 0, %s118
      %s119 = sphi 0, %s116
      %s120 = sphi 0, %s119
      %s136 = sphi 0, %s120
      %s144 = sphi 0, %s146
      %s147 = sphi 0, %s144
      %s148 = sphi 0, %s147
      %s164 = sphi 0, %s148
    $region4: #{tpu_custom_call.1} parent=1 // loop_header_branch
      %18 = sbr.rel (%p16) target = $region8
    $region5: #{tpu_custom_call.1} parent=1 // loop_body
      %s20 = ssub.s32 %s15, 1
      %s21 = ssub.s32 %s15, 2
      %s28 = sadd.s32 1, %s23
      %p29 = scmp.ge.s32.totalorder %s28, 2
      %s30 = scalar_select %p29, 0, %s28
      %s31 = sadd.s32 1, %s22
      %s32 = scalar_select %p29, %s31, %s22
      %p33 = scmp.ge.s32.totalorder %s32, 2
      %s34 = scalar_select %p33, 0, %s32
      %s35 = ssub.s32 %s22, %s34
      %s36 = ssub.s32 %s23, %s30
      %s37 = sor.u32 %s35, %s36
      %p38 = scmp.eq.s32.totalorder %s37, 0
      %s40 = sadd.s32 %s39, 1
      %s41 = scalar_select %p38, %s39, %s40
      %p44 = pneg %p38
      %p45 = scmp.eq.s32.totalorder %s15, 3
      %p46 = por %p44, %p45
      %p47 = scmp.ne.s32.totalorder %s39, %s42
      %p48 = scmp.eq.s32.totalorder %s15, 0
      %p49 = por %p47, %p48
      %p50 = scmp.ne.s32.totalorder %s39, %s42
      %p51 = scmp.eq.s32.totalorder %s20, 3
      %p52 = por %p50, %p51
      %p53 = scmp.ne.s32.totalorder %s42, %s43
      %p54 = scmp.eq.s32.totalorder %s20, 0
      %p55 = por %p53, %p54
      %p56 = scmp.ne.s32.totalorder %s42, %s43
      %p57 = scmp.eq.s32.totalorder %s21, 3
      %p58 = por %p56, %p57
      %p60 = scmp.ne.s32.totalorder %s43, %s59
      %p61 = scmp.eq.s32.totalorder %s21, 0
      %p62 = por %p60, %p61
      %s64 = sadd.s32 %s63, 1
      %p67 = scmp.eq.s32.totalorder %s15, 3
      %p68 = scmp.ne.s32.totalorder %s63, %s65
      %p69 = scmp.eq.s32.totalorder %s15, 0
      %p70 = por %p68, %p69
      %p71 = scmp.ne.s32.totalorder %s63, %s65
      %p72 = scmp.eq.s32.totalorder %s20, 3
      %p73 = por %p71, %p72
      %p74 = scmp.ne.s32.totalorder %s65, %s66
      %p75 = scmp.eq.s32.totalorder %s20, 0
      %p76 = por %p74, %p75
      %p77 = scmp.ne.s32.totalorder %s65, %s66
      %p78 = scmp.eq.s32.totalorder %s21, 3
      %p79 = por %p77, %p78
      %p81 = scmp.ne.s32.totalorder %s66, %s80
      %p82 = scmp.eq.s32.totalorder %s21, 0
      %p83 = por %p81, %p82
      %s84 = ssub.s32 %s22, %s34
      %s85 = ssub.s32 %s23, %s30
      %s86 = sor.u32 %s84, %s85
      %p87 = scmp.eq.s32.totalorder %s86, 0
      %s89 = sadd.s32 %s88, 1
      %s90 = scalar_select %p87, %s88, %s89
      %p93 = pneg %p87
      %p94 = scmp.eq.s32.totalorder %s15, 3
      %p95 = por %p93, %p94
      %p96 = scmp.ne.s32.totalorder %s88, %s91
      %p97 = scmp.eq.s32.totalorder %s15, 0
      %p98 = por %p96, %p97
      %p99 = scmp.ne.s32.totalorder %s88, %s91
      %p100 = scmp.eq.s32.totalorder %s20, 3
      %p101 = por %p99, %p100
      %p102 = scmp.ne.s32.totalorder %s91, %s92
      %p103 = scmp.eq.s32.totalorder %s20, 0
      %p104 = por %p102, %p103
      %p105 = scmp.ne.s32.totalorder %s91, %s92
      %p106 = scmp.eq.s32.totalorder %s21, 3
      %p107 = por %p105, %p106
      %p109 = scmp.ne.s32.totalorder %s92, %s108
      %p110 = scmp.eq.s32.totalorder %s21, 0
      %p111 = por %p109, %p110
      %s112 = ssub.s32 %s22, %s34
      %s113 = ssub.s32 %s23, %s30
      %s114 = sor.u32 %s112, %s113
      %p115 = scmp.eq.s32.totalorder %s114, 0
      %s117 = sadd.s32 %s116, 1
      %s118 = scalar_select %p115, %s116, %s117
      %p121 = pneg %p115
      %p122 = scmp.eq.s32.totalorder %s15, 3
      %p123 = por %p121, %p122
      %p124 = scmp.ne.s32.totalorder %s116, %s119
      %p125 = scmp.eq.s32.totalorder %s15, 0
      %p126 = por %p124, %p125
      %p127 = scmp.ne.s32.totalorder %s116, %s119
      %p128 = scmp.eq.s32.totalorder %s20, 3
      %p129 = por %p127, %p128
      %p130 = scmp.ne.s32.totalorder %s119, %s120
      %p131 = scmp.eq.s32.totalorder %s20, 0
      %p132 = por %p130, %p131
      %p133 = scmp.ne.s32.totalorder %s119, %s120
      %p134 = scmp.eq.s32.totalorder %s21, 3
      %p135 = por %p133, %p134
      %p137 = scmp.ne.s32.totalorder %s120, %s136
      %p138 = scmp.eq.s32.totalorder %s21, 0
      %p139 = por %p137, %p138
      %s140 = ssub.s32 %s22, %s34
      %s141 = ssub.s32 %s23, %s30
      %s142 = sor.u32 %s140, %s141
      %p143 = scmp.eq.s32.totalorder %s142, 0
      %s145 = sadd.s32 %s144, 1
      %s146 = scalar_select %p143, %s144, %s145
      %p149 = pneg %p143
      %p150 = scmp.eq.s32.totalorder %s15, 3
      %p151 = por %p149, %p150
      %p152 = scmp.ne.s32.totalorder %s144, %s147
      %p153 = scmp.eq.s32.totalorder %s15, 0
      %p154 = por %p152, %p153
      %p155 = scmp.ne.s32.totalorder %s144, %s147
      %p156 = scmp.eq.s32.totalorder %s20, 3
      %p157 = por %p155, %p156
      %p158 = scmp.ne.s32.totalorder %s147, %s148
      %p159 = scmp.eq.s32.totalorder %s20, 0
      %p160 = por %p158, %p159
      %p161 = scmp.ne.s32.totalorder %s147, %s148
      %p162 = scmp.eq.s32.totalorder %s21, 3
      %p163 = por %p161, %p162
      %p165 = scmp.ne.s32.totalorder %s148, %s164
      %p166 = scmp.eq.s32.totalorder %s21, 0
      %p167 = por %p165, %p166
      %p168 = scmp.le.s32.totalorder 1, %s15
      %p169 = scmp.lt.s32.totalorder %s15, 5
      %p170 = pnand %p168, %p169
      %p171 = pneg %p170
      // Predicated region
      $region9: #{tpu_custom_call.1} parent=5 // pred_check
        _
      $region10: #{tpu_custom_call.1} parent=5 // pred_check_branch
        %173 = sbr.rel (%p170) target = $region12
      $region11: #{tpu_custom_call.1} parent=5 // pred_region
        %s174 = ssub.s32 %s15, 1
        // Predicated region
        $region13: #{tpu_custom_call.1} parent=11 // pred_check
          %p175 = pneg %p76
        $region14: #{tpu_custom_call.1} parent=11 // pred_check_branch
          %177 = sbr.rel (%p175) target = $region16
        $region15: #{tpu_custom_call.1} parent=11 // pred_region
          %s179 = ssub.s32 256, 256
          %180 = vsyncadd [#allocation5], %s179
          %s181 = sshll.u32 [#allocation4], 4
          %s182 = int_to_ptr.vmem [resolvable:$true] %s181
          %187 = dma.hbm_to_vmem [thread:$0]  %s1, 256, %s182, [#allocation5], 64, 64, 4
        $region16: #{tpu_custom_call.1} parent=11 // pred_fallthru
          _
      $region12: #{tpu_custom_call.1} parent=5 // pred_fallthru
        _
      %p188 = scmp.lt.s32.totalorder %s15, 4
      // Predicated region
      $region17: #{tpu_custom_call.1} parent=5 // pred_check
        %p189 = pneg %p188
      $region18: #{tpu_custom_call.1} parent=5 // pred_check_branch
        %191 = sbr.rel (%p189) target = $region20
      $region19: #{tpu_custom_call.1} parent=5 // pred_region
        // Predicated region
        $region21: #{tpu_custom_call.1} parent=19 // pred_check
          %p192 = pneg %p49
        $region22: #{tpu_custom_call.1} parent=19 // pred_check_branch
          %194 = sbr.rel (%p192) target = $region24
        $region23: #{tpu_custom_call.1} parent=19 // pred_region
          %s195 = sand.u32 %s39, 1
          %s196 = scalar_lea.sflag [#allocation3], %s195
          %s197 = sand.u32 %s39, 1
          %s198 = smul.addr %s197, 4
          %s199 = scalar_lea.vmem [#allocation2], %s198
          %s201 = ssub.s32 64, 64
          %202 = vsyncadd %s196, %s201
          %s203 = smul.addr %s22, 2
          %s204 = sadd.s32 %s23, %s203
          %s205 = smul.addr %s204, 64
          %s206 = scalar_lea.hbm %s0, %s205
          %s208 = sshll.u32 %s199, 4
          %s209 = int_to_ptr.vmem [resolvable:$true] %s208
          %211 = dma.hbm_to_vmem [thread:$0]  %s206, 64, %s209, %s196
        $region24: #{tpu_custom_call.1} parent=19 // pred_fallthru
          _
      $region20: #{tpu_custom_call.1} parent=5 // pred_fallthru
        _
      %p212 = scmp.le.s32.totalorder 1, %s15
      %p213 = scmp.lt.s32.totalorder %s15, 5
      %p214 = pnand %p212, %p213
      %p215 = pneg %p214
      // Predicated region
      $region25: #{tpu_custom_call.1} parent=5 // pred_check
        _
      $region26: #{tpu_custom_call.1} parent=5 // pred_check_branch
        %217 = sbr.rel (%p214) target = $region28
      $region27: #{tpu_custom_call.1} parent=5 // pred_region
        %s218 = ssub.s32 %s15, 1
        %s219 = sand.u32 %s42, 1
        %s220 = scalar_lea.sflag [#allocation3], %s219
        %s221 = sand.u32 %s42, 1
        %s222 = smul.addr %s221, 4
        %s223 = scalar_lea.vmem [#allocation2], %s222
        // Predicated region
        $region29: #{tpu_custom_call.1} parent=27 // pred_check
          %p224 = pneg %p55
        $region30: #{tpu_custom_call.1} parent=27 // pred_check_branch
          %226 = sbr.rel (%p224) target = $region32
        $region31: #{tpu_custom_call.1} parent=27 // pred_region
          %227 = dma.done %s220, 64
        $region32: #{tpu_custom_call.1} parent=27 // pred_fallthru
          _
        // Predicated region
        $region33: #{tpu_custom_call.1} parent=27 // pred_check
          %p228 = pneg %p76
        $region34: #{tpu_custom_call.1} parent=27 // pred_check_branch
          %230 = sbr.rel (%p228) target = $region36
        $region35: #{tpu_custom_call.1} parent=27 // pred_region
          %231 = dma.done [#allocation5], 256
        $region36: #{tpu_custom_call.1} parent=27 // pred_fallthru
          _
        %s232 = sand.u32 %s42, 1
        %s233 = scalar_lea.sflag [#allocation3], %s232
        %s234 = sand.u32 %s42, 1
        %s235 = smul.addr %s234, 4
        %s236 = scalar_lea.vmem [#allocation2], %s235
        %p237 = pneg %p55
        %p238 = pneg %p52
        %p239 = pneg %p76
        %p240 = pneg %p73
        %p241 = pneg %p104
        %p242 = pneg %p101
        %s243 = sand.u32 %s91, 1
        %s244 = sand.u32 %s91, 1
        %s245 = smul.addr %s244, 16
        %s246 = scalar_lea.vmem [#allocation6], %s245
        %p247 = pneg %p132
        %p248 = pneg %p129
        %s249 = sand.u32 %s119, 1
        %s250 = sand.u32 %s119, 1
        %s251 = smul.addr %s250, 16
        %s252 = scalar_lea.vmem [#allocation7], %s251
        %p253 = pneg %p160
        %p254 = pneg %p157
        %s255 = sand.u32 %s147, 1
        %s256 = sand.u32 %s147, 1
        %s257 = smul.addr %s256, 16
        %s258 = scalar_lea.vmem [#allocation8], %s257
        %v260 = vld [vmem:[%s223] sm:$0xf]
        %v261 = vld [vmem:[#allocation4] sm:$0xf]
        %v262 = vld [vmem:[#allocation4 + $0x4] sm:$0xf]
        %v263 = vld [vmem:[#allocation4 + $0x8] sm:$0xf]
        %v264 = vld [vmem:[#allocation4 + $0xc] sm:$0xf]
        %v269 = vunpack.c.l.b16 %v261
        %v270 = vunpack.c.l.b16 %v262
        %v271 = vunpack.c.l.b16 %v263
        %v272 = vunpack.c.l.b16 %v264
        %v273 = vpack.c.b16 %v270, %v269
        %v274 = vpack.c.b16 %v272, %v271
        %vm277 = vcmask 261120
        %v279 = vsel %vm277, %v260, 0
        %281 = vmatprep.subr.bf16.mxu0 0
        %282 = vmatpush1.bf16.msra.mxu0 %v273
        %283 = vmatprep.subr.bf16.mxu0 0
        %284 = vmatpush1.bf16.msra.mxu0 %v274
        %285 = vmatprep.subr.bf16.mxu0 0
        %286 = vmatpush1.bf16.msra.mxu0 0
        %287 = vmatprep.subr.bf16.mxu0 0
        %288 = vmatpush1.bf16.msra.mxu0 0
        %289 = vmatprep.subr.bf16.mxu0 0
        %290 = vmatpush1.bf16.msra.mxu0 0
        %291 = vmatprep.subr.bf16.mxu0 0
        %292 = vmatpush1.bf16.msra.mxu0 0
        %293 = vmatprep.subr.bf16.mxu0 0
        %294 = vmatpush1.bf16.msra.mxu0 0
        %295 = vmatprep.subr.bf16.mxu0 0
        %296 = vmatpush1.bf16.msra.mxu0 0
        %297 = vmatprep.subr.bf16.mxu0 0
        %298 = vmatpush1.bf16.msra.mxu0 0
        %299 = vmatprep.subr.bf16.mxu0 0
        %300 = vmatpush1.bf16.msra.mxu0 0
        %301 = vmatprep.subr.bf16.mxu0 0
        %302 = vmatpush1.bf16.msra.mxu0 0
        %303 = vmatprep.subr.bf16.mxu0 0
        %304 = vmatpush1.bf16.msra.mxu0 0
        %305 = vmatprep.subr.bf16.mxu0 0
        %306 = vmatpush1.bf16.msra.mxu0 0
        %307 = vmatprep.subr.bf16.mxu0 0
        %308 = vmatpush1.bf16.msra.mxu0 0
        %309 = vmatprep.subr.bf16.mxu0 0
        %310 = vmatpush1.bf16.msra.mxu0 0
        %311 = vmatprep.subr.bf16.mxu0 0
        %312 = vmatpush1.bf16.msra.mxu0 0
        %313 = vmatprep.mubr.bf16.mxu0 0
        %314 = vmatmul.mubr.bf16.gmra.mrb[0].mxu0 %v279
        %v315 = vpop.f32.mrb[0].mxu0
        %v316 = vadd.f32 0.0, %v315
        %v317 = vpop.f32.mrb[0].mxu0
        %v318 = vpop.f32.mrb[0].mxu0
        %v319 = vpop.f32.mrb[0].mxu0
        %320 = vdwg.mxu0
        %v321 = vpack.c.bf16 %v316, %v316
        %vm322 = vcmask 60416
        %323 = vst.msk [vmem:[%s246] sm:$0xf] %vm322, %v321
        %v325 = vunpack.c.l.b16 %v321
        %v326 = vpack.c.b16 %v325, %v325
        %327 = vrot.lane.b32.xlu0 %v326, 96
        %v328 = vpop.permute.xlu0 %327
        %330 = vst.msk [vmem:[%s252] sm:$0xf] %vm322, %v328
        %331 = vrot.lane.b32.xlu0 %v326, 64
        %v332 = vpop.permute.xlu0 %331
        %334 = vst.msk [vmem:[%s258] sm:$0xf] %vm322, %v332
        %335 = vrot.lane.b32.xlu0 %v326, 120
        %v336 = vpop.permute.xlu0 %335
        %s338 = scalar_lea.vmem %s246, 4 [#allocation6]
        %339 = vst.msk [vmem:[%s338] sm:$0xf] %vm322, %v336
        %340 = vrot.lane.b32.xlu0 %v326, 88
        %v341 = vpop.permute.xlu0 %340
        %s343 = scalar_lea.vmem %s252, 4 [#allocation7]
        %344 = vst.msk [vmem:[%s343] sm:$0xf] %vm322, %v341
        %345 = vrot.lane.b32.xlu0 %v326, 56
        %v346 = vpop.permute.xlu0 %345
        %s348 = scalar_lea.vmem %s258, 4 [#allocation8]
        %349 = vst.msk [vmem:[%s348] sm:$0xf] %vm322, %v346
        %350 = vrot.lane.b32.xlu0 %v326, 112
        %v351 = vpop.permute.xlu0 %350
        %s353 = scalar_lea.vmem %s246, 8 [#allocation6]
        %354 = vst.msk [vmem:[%s353] sm:$0xf] %vm322, %v351
        %355 = vrot.lane.b32.xlu0 %v326, 80
        %v356 = vpop.permute.xlu0 %355
        %s358 = scalar_lea.vmem %s252, 8 [#allocation7]
        %359 = vst.msk [vmem:[%s358] sm:$0xf] %vm322, %v356
        %360 = vrot.lane.b32.xlu0 %v326, 48
        %v361 = vpop.permute.xlu0 %360
        %s363 = scalar_lea.vmem %s258, 8 [#allocation8]
        %364 = vst.msk [vmem:[%s363] sm:$0xf] %vm322, %v361
        %365 = vrot.lane.b32.xlu0 %v326, 104
        %v366 = vpop.permute.xlu0 %365
        %s368 = scalar_lea.vmem %s246, 12 [#allocation6]
        %369 = vst.msk [vmem:[%s368] sm:$0xf] %vm322, %v366
        %370 = vrot.lane.b32.xlu0 %v326, 72
        %v371 = vpop.permute.xlu0 %370
        %s373 = scalar_lea.vmem %s252, 12 [#allocation7]
        %374 = vst.msk [vmem:[%s373] sm:$0xf] %vm322, %v371
        %375 = vrot.lane.b32.xlu0 %v326, 40
        %v376 = vpop.permute.xlu0 %375
        %s378 = scalar_lea.vmem %s258, 12 [#allocation8]
        %379 = vst.msk [vmem:[%s378] sm:$0xf] %vm322, %v376
        %s380 = sand.u32 %s91, 1
        %s381 = sand.u32 %s91, 1
        %s382 = smul.addr %s381, 16
        %s383 = scalar_lea.vmem [#allocation6], %s382
        %s384 = sand.u32 %s119, 1
        %s385 = sand.u32 %s119, 1
        %s386 = smul.addr %s385, 16
        %s387 = scalar_lea.vmem [#allocation7], %s386
        %s388 = sand.u32 %s147, 1
        %s389 = sand.u32 %s147, 1
        %s390 = smul.addr %s389, 16
        %s391 = scalar_lea.vmem [#allocation8], %s390
        // Predicated region
        $region37: #{tpu_custom_call.1} parent=27 // pred_check
          %p392 = pneg %p101
        $region38: #{tpu_custom_call.1} parent=27 // pred_check_branch
          %394 = sbr.rel (%p392) target = $region40
        $region39: #{tpu_custom_call.1} parent=27 // pred_region
          %s395 = smul.addr %s24, 8
          %s396 = sadd.s32 %s25, %s395
          %s397 = smul.addr %s396, 4
          %s398 = scalar_lea.vmem %s2, %s397
          // Predicated region
          $region41: #{tpu_custom_call.1} parent=39 // pred_check
            _
          $region42: #{tpu_custom_call.1} parent=39 // pred_check_branch
            %400 = sbr.rel (0) target = $region44
          $region43: #{tpu_custom_call.1} parent=39 // pred_region
            // Predicated region
            $region45: #{tpu_custom_call.1} parent=43 // pred_check
              _
            $region46: #{tpu_custom_call.1} parent=43 // pred_check_branch
              %402 = sbr.rel target = $region48
            $region47: #{tpu_custom_call.1} parent=43 // pred_region
              // Predicated region
              $region60: #{tpu_custom_call.1} parent=47 // pred_check
                _
              $region61: #{tpu_custom_call.1} parent=47 // pred_check_branch
                %423 = sbr.rel (0) target = $region63
              $region62: #{tpu_custom_call.1} parent=47 // pred_region
                loop: start=0, step=1, limit=1
                $region64: #{tpu_custom_call.1} parent=62 // loop_pre_header
                  _
                $region65: #{tpu_custom_call.1} parent=62 // loop_header
                  %s425 = sphi 0, %s429
                  %p426 = scmp.ge.s32.totalorder %s425, 1
                  %s430 = sphi %s383, %s383
                  %s431 = sphi %s398, %s398
                $region66: #{tpu_custom_call.1} parent=62 // loop_header_branch
                  %428 = sbr.rel (%p426) target = $region70
                $region67: #{tpu_custom_call.1} parent=62 // loop_body
                  _
                $region68: #{tpu_custom_call.1} parent=62 // loop_footer
                  %s429 = sadd.s32 1, %s425
                $region69: #{tpu_custom_call.1} parent=62 // loop_footer_branch
                  %424 = sbr.rel target = $region65
                $region70: #{tpu_custom_call.1} parent=62 // loop_exit
                  _
                loop: start=0, step=1, limit=1
                $region71: #{tpu_custom_call.1} parent=62 // loop_pre_header
                  _
                $region72: #{tpu_custom_call.1} parent=62 // loop_header
                  %s434 = sphi 0, %s438
                  %p435 = scmp.ge.s32.totalorder %s434, 1
                  %s439 = sphi %s383, %s383
                  %s440 = sphi %s398, %s398
                $region73: #{tpu_custom_call.1} parent=62 // loop_header_branch
                  %437 = sbr.rel (%p435) target = $region77
                $region74: #{tpu_custom_call.1} parent=62 // loop_body
                  %v441 = vld [vmem:[%s439] sm:$0xf]
                  %442 = vst [vmem:[%s440] sm:$0xf] %v441
                  %v443 = vld [vmem:[%s439 + $0x4] sm:$0xf]
                  %444 = vst [vmem:[%s440 + $0x8] sm:$0xf] %v443
                  %v445 = vld [vmem:[%s439 + $0x8] sm:$0xf]
                  %446 = vst [vmem:[%s440 + $0x10] sm:$0xf] %v445
                  %v447 = vld [vmem:[%s439 + $0xc] sm:$0xf]
                  %448 = vst [vmem:[%s440 + $0x18] sm:$0xf] %v447
                $region75: #{tpu_custom_call.1} parent=62 // loop_footer
                  %s438 = sadd.s32 1, %s434
                $region76: #{tpu_custom_call.1} parent=62 // loop_footer_branch
                  %433 = sbr.rel target = $region72
                $region77: #{tpu_custom_call.1} parent=62 // loop_exit
                  _
              $region63: #{tpu_custom_call.1} parent=47 // pred_fallthru
                _
            $region48: #{tpu_custom_call.1} parent=43 // pred_fallthru
              _
            // Predicated region
            $region49: #{tpu_custom_call.1} parent=43 // pred_check
              _
            $region50: #{tpu_custom_call.1} parent=43 // pred_check_branch
              %404 = sbr.rel (0) target = $region52
            $region51: #{tpu_custom_call.1} parent=43 // pred_region
              loop: start=0, step=1, limit=1
              $region53: #{tpu_custom_call.1} parent=51 // loop_pre_header
                _
              $region54: #{tpu_custom_call.1} parent=51 // loop_header
                %s407 = sphi 0, %s411
                %p408 = scmp.ge.s32.totalorder %s407, 1
                %s412 = sphi %s383, %s383
                %s413 = sphi %s398, %s398
              $region55: #{tpu_custom_call.1} parent=51 // loop_header_branch
                %410 = sbr.rel (%p408) target = $region59
              $region56: #{tpu_custom_call.1} parent=51 // loop_body
                %v414 = vld [vmem:[%s412] sm:$0xf]
                %415 = vst [vmem:[%s413] sm:$0xf] %v414
                %v416 = vld [vmem:[%s412 + $0x4] sm:$0xf]
                %417 = vst [vmem:[%s413 + $0x8] sm:$0xf] %v416
                %v418 = vld [vmem:[%s412 + $0x8] sm:$0xf]
                %419 = vst [vmem:[%s413 + $0x10] sm:$0xf] %v418
                %v420 = vld [vmem:[%s412 + $0xc] sm:$0xf]
                %421 = vst [vmem:[%s413 + $0x18] sm:$0xf] %v420
              $region57: #{tpu_custom_call.1} parent=51 // loop_footer
                %s411 = sadd.s32 1, %s407
              $region58: #{tpu_custom_call.1} parent=51 // loop_footer_branch
                %406 = sbr.rel target = $region54
              $region59: #{tpu_custom_call.1} parent=51 // loop_exit
                _
            $region52: #{tpu_custom_call.1} parent=43 // pred_fallthru
              _
          $region44: #{tpu_custom_call.1} parent=39 // pred_fallthru
            _
          %449 = vnop
        $region40: #{tpu_custom_call.1} parent=27 // pred_fallthru
          _
        // Predicated region
        $region78: #{tpu_custom_call.1} parent=27 // pred_check
          %p450 = pneg %p129
        $region79: #{tpu_custom_call.1} parent=27 // pred_check_branch
          %452 = sbr.rel (%p450) target = $region81
        $region80: #{tpu_custom_call.1} parent=27 // pred_region
          %s453 = smul.addr %s24, 8
          %s454 = sadd.s32 %s25, %s453
          %s455 = smul.addr %s454, 4
          %s456 = scalar_lea.vmem %s3, %s455
          // Predicated region
          $region82: #{tpu_custom_call.1} parent=80 // pred_check
            _
          $region83: #{tpu_custom_call.1} parent=80 // pred_check_branch
            %458 = sbr.rel (0) target = $region85
          $region84: #{tpu_custom_call.1} parent=80 // pred_region
            // Predicated region
            $region86: #{tpu_custom_call.1} parent=84 // pred_check
              _
            $region87: #{tpu_custom_call.1} parent=84 // pred_check_branch
              %460 = sbr.rel target = $region89
            $region88: #{tpu_custom_call.1} parent=84 // pred_region
              // Predicated region
              $region101: #{tpu_custom_call.1} parent=88 // pred_check
                _
              $region102: #{tpu_custom_call.1} parent=88 // pred_check_branch
                %481 = sbr.rel (0) target = $region104
              $region103: #{tpu_custom_call.1} parent=88 // pred_region
                loop: start=0, step=1, limit=1
                $region105: #{tpu_custom_call.1} parent=103 // loop_pre_header
                  _
                $region106: #{tpu_custom_call.1} parent=103 // loop_header
                  %s483 = sphi 0, %s487
                  %p484 = scmp.ge.s32.totalorder %s483, 1
                  %s488 = sphi %s387, %s387
                  %s489 = sphi %s456, %s456
                $region107: #{tpu_custom_call.1} parent=103 // loop_header_branch
                  %486 = sbr.rel (%p484) target = $region111
                $region108: #{tpu_custom_call.1} parent=103 // loop_body
                  _
                $region109: #{tpu_custom_call.1} parent=103 // loop_footer
                  %s487 = sadd.s32 1, %s483
                $region110: #{tpu_custom_call.1} parent=103 // loop_footer_branch
                  %482 = sbr.rel target = $region106
                $region111: #{tpu_custom_call.1} parent=103 // loop_exit
                  _
                loop: start=0, step=1, limit=1
                $region112: #{tpu_custom_call.1} parent=103 // loop_pre_header
                  _
                $region113: #{tpu_custom_call.1} parent=103 // loop_header
                  %s492 = sphi 0, %s496
                  %p493 = scmp.ge.s32.totalorder %s492, 1
                  %s497 = sphi %s387, %s387
                  %s498 = sphi %s456, %s456
                $region114: #{tpu_custom_call.1} parent=103 // loop_header_branch
                  %495 = sbr.rel (%p493) target = $region118
                $region115: #{tpu_custom_call.1} parent=103 // loop_body
                  %v499 = vld [vmem:[%s497] sm:$0xf]
                  %500 = vst [vmem:[%s498] sm:$0xf] %v499
                  %v501 = vld [vmem:[%s497 + $0x4] sm:$0xf]
                  %502 = vst [vmem:[%s498 + $0x8] sm:$0xf] %v501
                  %v503 = vld [vmem:[%s497 + $0x8] sm:$0xf]
                  %504 = vst [vmem:[%s498 + $0x10] sm:$0xf] %v503
                  %v505 = vld [vmem:[%s497 + $0xc] sm:$0xf]
                  %506 = vst [vmem:[%s498 + $0x18] sm:$0xf] %v505
                $region116: #{tpu_custom_call.1} parent=103 // loop_footer
                  %s496 = sadd.s32 1, %s492
                $region117: #{tpu_custom_call.1} parent=103 // loop_footer_branch
                  %491 = sbr.rel target = $region113
                $region118: #{tpu_custom_call.1} parent=103 // loop_exit
                  _
              $region104: #{tpu_custom_call.1} parent=88 // pred_fallthru
                _
            $region89: #{tpu_custom_call.1} parent=84 // pred_fallthru
              _
            // Predicated region
            $region90: #{tpu_custom_call.1} parent=84 // pred_check
              _
            $region91: #{tpu_custom_call.1} parent=84 // pred_check_branch
              %462 = sbr.rel (0) target = $region93
            $region92: #{tpu_custom_call.1} parent=84 // pred_region
              loop: start=0, step=1, limit=1
              $region94: #{tpu_custom_call.1} parent=92 // loop_pre_header
                _
              $region95: #{tpu_custom_call.1} parent=92 // loop_header
                %s465 = sphi 0, %s469
                %p466 = scmp.ge.s32.totalorder %s465, 1
                %s470 = sphi %s387, %s387
                %s471 = sphi %s456, %s456
              $region96: #{tpu_custom_call.1} parent=92 // loop_header_branch
                %468 = sbr.rel (%p466) target = $region100
              $region97: #{tpu_custom_call.1} parent=92 // loop_body
                %v472 = vld [vmem:[%s470] sm:$0xf]
                %473 = vst [vmem:[%s471] sm:$0xf] %v472
                %v474 = vld [vmem:[%s470 + $0x4] sm:$0xf]
                %475 = vst [vmem:[%s471 + $0x8] sm:$0xf] %v474
                %v476 = vld [vmem:[%s470 + $0x8] sm:$0xf]
                %477 = vst [vmem:[%s471 + $0x10] sm:$0xf] %v476
                %v478 = vld [vmem:[%s470 + $0xc] sm:$0xf]
                %479 = vst [vmem:[%s471 + $0x18] sm:$0xf] %v478
              $region98: #{tpu_custom_call.1} parent=92 // loop_footer
                %s469 = sadd.s32 1, %s465
              $region99: #{tpu_custom_call.1} parent=92 // loop_footer_branch
                %464 = sbr.rel target = $region95
              $region100: #{tpu_custom_call.1} parent=92 // loop_exit
                _
            $region93: #{tpu_custom_call.1} parent=84 // pred_fallthru
              _
          $region85: #{tpu_custom_call.1} parent=80 // pred_fallthru
            _
          %507 = vnop
        $region81: #{tpu_custom_call.1} parent=27 // pred_fallthru
          _
        // Predicated region
        $region119: #{tpu_custom_call.1} parent=27 // pred_check
          %p508 = pneg %p157
        $region120: #{tpu_custom_call.1} parent=27 // pred_check_branch
          %510 = sbr.rel (%p508) target = $region122
        $region121: #{tpu_custom_call.1} parent=27 // pred_region
          %s511 = smul.addr %s24, 8
          %s512 = sadd.s32 %s25, %s511
          %s513 = smul.addr %s512, 4
          %s514 = scalar_lea.vmem %s4, %s513
          // Predicated region
          $region123: #{tpu_custom_call.1} parent=121 // pred_check
            _
          $region124: #{tpu_custom_call.1} parent=121 // pred_check_branch
            %516 = sbr.rel (0) target = $region126
          $region125: #{tpu_custom_call.1} parent=121 // pred_region
            // Predicated region
            $region127: #{tpu_custom_call.1} parent=125 // pred_check
              _
            $region128: #{tpu_custom_call.1} parent=125 // pred_check_branch
              %518 = sbr.rel target = $region130
            $region129: #{tpu_custom_call.1} parent=125 // pred_region
              // Predicated region
              $region142: #{tpu_custom_call.1} parent=129 // pred_check
                _
              $region143: #{tpu_custom_call.1} parent=129 // pred_check_branch
                %539 = sbr.rel (0) target = $region145
              $region144: #{tpu_custom_call.1} parent=129 // pred_region
                loop: start=0, step=1, limit=1
                $region146: #{tpu_custom_call.1} parent=144 // loop_pre_header
                  _
                $region147: #{tpu_custom_call.1} parent=144 // loop_header
                  %s541 = sphi 0, %s545
                  %p542 = scmp.ge.s32.totalorder %s541, 1
                  %s546 = sphi %s391, %s391
                  %s547 = sphi %s514, %s514
                $region148: #{tpu_custom_call.1} parent=144 // loop_header_branch
                  %544 = sbr.rel (%p542) target = $region152
                $region149: #{tpu_custom_call.1} parent=144 // loop_body
                  _
                $region150: #{tpu_custom_call.1} parent=144 // loop_footer
                  %s545 = sadd.s32 1, %s541
                $region151: #{tpu_custom_call.1} parent=144 // loop_footer_branch
                  %540 = sbr.rel target = $region147
                $region152: #{tpu_custom_call.1} parent=144 // loop_exit
                  _
                loop: start=0, step=1, limit=1
                $region153: #{tpu_custom_call.1} parent=144 // loop_pre_header
                  _
                $region154: #{tpu_custom_call.1} parent=144 // loop_header
                  %s550 = sphi 0, %s554
                  %p551 = scmp.ge.s32.totalorder %s550, 1
                  %s555 = sphi %s391, %s391
                  %s556 = sphi %s514, %s514
                $region155: #{tpu_custom_call.1} parent=144 // loop_header_branch
                  %553 = sbr.rel (%p551) target = $region159
                $region156: #{tpu_custom_call.1} parent=144 // loop_body
                  %v557 = vld [vmem:[%s555] sm:$0xf]
                  %558 = vst [vmem:[%s556] sm:$0xf] %v557
                  %v559 = vld [vmem:[%s555 + $0x4] sm:$0xf]
                  %560 = vst [vmem:[%s556 + $0x8] sm:$0xf] %v559
                  %v561 = vld [vmem:[%s555 + $0x8] sm:$0xf]
                  %562 = vst [vmem:[%s556 + $0x10] sm:$0xf] %v561
                  %v563 = vld [vmem:[%s555 + $0xc] sm:$0xf]
                  %564 = vst [vmem:[%s556 + $0x18] sm:$0xf] %v563
                $region157: #{tpu_custom_call.1} parent=144 // loop_footer
                  %s554 = sadd.s32 1, %s550
                $region158: #{tpu_custom_call.1} parent=144 // loop_footer_branch
                  %549 = sbr.rel target = $region154
                $region159: #{tpu_custom_call.1} parent=144 // loop_exit
                  _
              $region145: #{tpu_custom_call.1} parent=129 // pred_fallthru
                _
            $region130: #{tpu_custom_call.1} parent=125 // pred_fallthru
              _
            // Predicated region
            $region131: #{tpu_custom_call.1} parent=125 // pred_check
              _
            $region132: #{tpu_custom_call.1} parent=125 // pred_check_branch
              %520 = sbr.rel (0) target = $region134
            $region133: #{tpu_custom_call.1} parent=125 // pred_region
              loop: start=0, step=1, limit=1
              $region135: #{tpu_custom_call.1} parent=133 // loop_pre_header
                _
              $region136: #{tpu_custom_call.1} parent=133 // loop_header
                %s523 = sphi 0, %s527
                %p524 = scmp.ge.s32.totalorder %s523, 1
                %s528 = sphi %s391, %s391
                %s529 = sphi %s514, %s514
              $region137: #{tpu_custom_call.1} parent=133 // loop_header_branch
                %526 = sbr.rel (%p524) target = $region141
              $region138: #{tpu_custom_call.1} parent=133 // loop_body
                %v530 = vld [vmem:[%s528] sm:$0xf]
                %531 = vst [vmem:[%s529] sm:$0xf] %v530
                %v532 = vld [vmem:[%s528 + $0x4] sm:$0xf]
                %533 = vst [vmem:[%s529 + $0x8] sm:$0xf] %v532
                %v534 = vld [vmem:[%s528 + $0x8] sm:$0xf]
                %535 = vst [vmem:[%s529 + $0x10] sm:$0xf] %v534
                %v536 = vld [vmem:[%s528 + $0xc] sm:$0xf]
                %537 = vst [vmem:[%s529 + $0x18] sm:$0xf] %v536
              $region139: #{tpu_custom_call.1} parent=133 // loop_footer
                %s527 = sadd.s32 1, %s523
              $region140: #{tpu_custom_call.1} parent=133 // loop_footer_branch
                %522 = sbr.rel target = $region136
              $region141: #{tpu_custom_call.1} parent=133 // loop_exit
                _
            $region134: #{tpu_custom_call.1} parent=125 // pred_fallthru
              _
          $region126: #{tpu_custom_call.1} parent=121 // pred_fallthru
            _
          %565 = vnop
        $region122: #{tpu_custom_call.1} parent=27 // pred_fallthru
          _
      $region28: #{tpu_custom_call.1} parent=5 // pred_fallthru
        _
      %p566 = scmp.le.s32.totalorder 2, %s15
      // Predicated region
      $region160: #{tpu_custom_call.1} parent=5 // pred_check
        %p567 = pneg %p566
      $region161: #{tpu_custom_call.1} parent=5 // pred_check_branch
        %569 = sbr.rel (%p567) target = $region163
      $region162: #{tpu_custom_call.1} parent=5 // pred_region
        %s570 = ssub.s32 %s15, 2
        // Predicated region
        $region164: #{tpu_custom_call.1} parent=162 // pred_check
          %p571 = pneg %p107
        $region165: #{tpu_custom_call.1} parent=162 // pred_check_branch
          %573 = sbr.rel (%p571) target = $region167
        $region166: #{tpu_custom_call.1} parent=162 // pred_region
          %s574 = sand.u32 %s92, 1
          %s575 = sand.u32 %s92, 1
          %s576 = smul.addr %s575, 16
          %s577 = scalar_lea.vmem [#allocation6], %s576
        $region167: #{tpu_custom_call.1} parent=162 // pred_fallthru
          _
        // Predicated region
        $region168: #{tpu_custom_call.1} parent=162 // pred_check
          %p578 = pneg %p135
        $region169: #{tpu_custom_call.1} parent=162 // pred_check_branch
          %580 = sbr.rel (%p578) target = $region171
        $region170: #{tpu_custom_call.1} parent=162 // pred_region
          %s581 = sand.u32 %s120, 1
          %s582 = sand.u32 %s120, 1
          %s583 = smul.addr %s582, 16
          %s584 = scalar_lea.vmem [#allocation7], %s583
        $region171: #{tpu_custom_call.1} parent=162 // pred_fallthru
          _
        // Predicated region
        $region172: #{tpu_custom_call.1} parent=162 // pred_check
          %p585 = pneg %p163
        $region173: #{tpu_custom_call.1} parent=162 // pred_check_branch
          %587 = sbr.rel (%p585) target = $region175
        $region174: #{tpu_custom_call.1} parent=162 // pred_region
          %s588 = sand.u32 %s148, 1
          %s589 = sand.u32 %s148, 1
          %s590 = smul.addr %s589, 16
          %s591 = scalar_lea.vmem [#allocation8], %s590
        $region175: #{tpu_custom_call.1} parent=162 // pred_fallthru
          _
      $region163: #{tpu_custom_call.1} parent=5 // pred_fallthru
        _
    $region6: #{tpu_custom_call.1} parent=1 // loop_footer
      %s19 = sadd.s32 1, %s15
    $region7: #{tpu_custom_call.1} parent=1 // loop_footer_branch
      %14 = sbr.rel target = $region3
    $region8: #{tpu_custom_call.1} parent=1 // loop_exit
      _
    %592 = vsyncpa [#allocation3], 1
    %s593 = scalar_lea.sflag [#allocation3], 1
    %594 = vsyncpa %s593, 1
    %595 = vsyncpa [#allocation5], 1

</llo_original>
